<compile_context>
chip_gen: v7x
topology: tpu7x:2x2x1
jax: 0.10.0
libtpu: 0.0.40
codegen_flags: <defaults>
</compile_context>

<pallas_src>
import math
from functools import partial

import jax
import jax.numpy as jnp
from jax.experimental import pallas as pl
from jax.experimental.pallas import tpu as pltpu


def _round_up(n: int, m: int) -> int:
    return (n + m - 1) // m * m


def _vmem_limit_bytes() -> int:
    """~70% of the chip's VMEM, with a safe default if the query is unavailable."""
    try:
        cap = int(pltpu.get_tpu_info().vmem_capacity_bytes)
    except Exception:
        cap = 64 * 1024 * 1024          # v7x per-TC capacity (smallest current gen)
    return max(16 * 1024 * 1024, min(int(cap * 0.7), 96 * 1024 * 1024))


def _sublane_multiple(dsize: int) -> int:
    # 8 rows for 4-byte, 16 for 2-byte, 32 for 1-byte dtypes.
    return 8 * max(1, 4 // dsize)


def _choose_tile_rows(total_rows: int, d_model: int, dsize: int,
                      vmem_limit: int, *, min_programs: int = 8) -> int:
    """Row-tile length from a VMEM byte budget (accounts for lane padding)."""
    lane_padded = _round_up(d_model, 128)
    sub = _sublane_multiple(dsize)
    # Per row of a block: x + out double-buffered in x dtype + ~3 f32 temporaries.
    per_row_vmem = lane_padded * (4 * dsize + 12)
    tile = max(sub, vmem_limit // per_row_vmem)
    # Target >= min_programs grid steps (pipeline overlap; 2 TCs on v7x), but
    # never shrink blocks below ~1 MiB of real x data (per-step overhead ~0.35us).
    min_rows_1mb = max(sub, (1 << 20) // (lane_padded * dsize))
    tile = min(tile, max(pl.cdiv(total_rows, min_programs), min_rows_1mb))
    if tile >= total_rows:
        return total_rows               # single full block: no divisibility needed
    tile = max(sub, (tile // sub) * sub)
    return total_rows if tile >= total_rows else tile


def _pe_add_rows_kernel(fp_ref, x_ref, o_ref, *, batch: int):
    """out = x + pe for flattened rows.

    fp_ref : (2, d_model) f32 — row 0: inv_freq, row 1: phase (0 or pi/2)
    x_ref  : (tile_rows, d_model) — rows are (seq, batch) pairs, row-major
    o_ref  : (tile_rows, d_model)
    """
    tile_rows, _ = x_ref.shape
    row0 = pl.program_id(0) * tile_rows            # partial last block is padded,
    rows = jax.lax.broadcasted_iota(jnp.int32, (tile_rows, 1), 0) + row0  # not shifted
    rows_f = rows.astype(jnp.float32)
    if batch == 1:
        pos = rows_f
    else:
        # floor((row + 0.5) / batch) == row // batch, exact for row < 2^23 and
        # never lands on an integer boundary, so f32 rounding cannot flip it.
        pos = jnp.floor((rows_f + 0.5) * jnp.float32(1.0 / batch))

    # Single transcendental per element: cos(x) expressed as sin(x + pi/2).
    angle = pos * fp_ref[0:1, :] + fp_ref[1:2, :]          # (tile_rows, d_model)
    pe = jnp.sin(angle)

    o_ref[...] = (x_ref[...].astype(jnp.float32) + pe).astype(o_ref.dtype)


def positional_encoding_forward(x, *, tile_rows=None):
    """x: [seq_len, batch, d_model] -> x + pe[:seq_len] (dropout never applied)."""
    seq_len, batch, d_model = x.shape
    assert d_model % 2 == 0, "sinusoidal PE requires even d_model (as in PyTorch original)"

    dsize = jnp.dtype(x.dtype).itemsize
    sub = _sublane_multiple(dsize)
    total_rows = seq_len * batch
    vmem_limit = _vmem_limit_bytes()

    if tile_rows is None:
        tile_rows = _choose_tile_rows(total_rows, d_model, dsize, vmem_limit)
    else:
        tile_rows = min(int(tile_rows), total_rows)
        if tile_rows < total_rows:
            tile_rows = max(sub, _round_up(tile_rows, sub))
    grid = (pl.cdiv(total_rows, tile_rows),)

    # Host-side inv_freq (identical exp() to the PyTorch table) + parity phase.
    half_idx = jnp.arange(0, d_model, 2, dtype=jnp.float32)                  # (D/2,)
    inv_freq_half = jnp.exp(half_idx * jnp.float32(-math.log(10000.0) / d_model))
    inv_freq = jnp.repeat(inv_freq_half, 2)                                  # (D,)
    phase = jnp.tile(jnp.array([0.0, math.pi / 2.0], jnp.float32), d_model // 2)
    fp = jnp.stack([inv_freq, phase], axis=0)                                # (2, D) f32

    # Row-major flatten (free layout reshape): row r <-> (seq = r//batch, b = r%batch).
    x2 = x.reshape(total_rows, d_model)

    out2 = pl.pallas_call(
        partial(_pe_add_rows_kernel, batch=batch),
        out_shape=jax.ShapeDtypeStruct((total_rows, d_model), x.dtype),
        grid_spec=pl.GridSpec(
            grid=grid,
            in_specs=[
                pl.BlockSpec((2, d_model), lambda i: (0, 0)),           # inv_freq/phase
                pl.BlockSpec((tile_rows, d_model), lambda i: (i, 0)),   # x rows
            ],
            out_specs=pl.BlockSpec((tile_rows, d_model), lambda i: (i, 0)),
        ),
        compiler_params=pltpu.CompilerParams(
            dimension_semantics=("parallel",),
            vmem_limit_bytes=vmem_limit,
        ),
        cost_estimate=pl.CostEstimate(
            flops=3 * total_rows * d_model,
            transcendentals=total_rows * d_model,
            bytes_accessed=2 * total_rows * d_model * dsize + 2 * d_model * 4,
        ),
    )(fp, x2)

    return out2.reshape(seq_len, batch, d_model)


def _reference_pe(d_model: int, seq_len: int):
    """Sinusoidal table built exactly like the PyTorch __init__ (plain JAX, f32)."""
    position = jnp.arange(seq_len, dtype=jnp.float32)[:, None]
    div_term = jnp.exp(jnp.arange(0, d_model, 2, dtype=jnp.float32)
                       * (-math.log(10000.0) / d_model))
    ang = position * div_term
    pe = jnp.zeros((seq_len, 1, d_model), jnp.float32)
    pe = pe.at[:, 0, 0::2].set(jnp.sin(ang))
    pe = pe.at[:, 0, 1::2].set(jnp.cos(ang))
    return pe


if __name__ == "__main__":
    key = jax.random.PRNGKey(0)

    # Shape consistent with the module's [seq_len, batch, d_model] convention.
    seq_len, batch, d_model = 8, 2, 32
    x = jax.random.normal(key, (seq_len, batch, d_model), dtype=jnp.float32)
    out = jax.block_until_ready(positional_encoding_forward(x))
    ref = x + _reference_pe(d_model, seq_len)
    assert out.shape == x.shape and out.dtype == x.dtype
    assert jnp.allclose(out, ref, atol=1e-4, rtol=1e-4), "mismatch vs reference"

    # Regression test (feedback): multi-block + partial last block with a forced
    # small tile — exercises padded-tail semantics and cross-block position math.
    seq2, batch2 = 37, 2
    x2 = jax.random.normal(jax.random.PRNGKey(0), (seq2, batch2, d_model),
                           dtype=jnp.float32)
    out2 = jax.block_until_ready(positional_encoding_forward(x2, tile_rows=16))
    ref2 = x2 + _reference_pe(d_model, seq2)
    assert jnp.allclose(out2, ref2, atol=1e-4, rtol=1e-4), "mismatch (partial block)"

    # bf16 activations (16-row sublane granularity; add done in f32, cast back).
    x3 = jax.random.normal(jax.random.PRNGKey(0),
                           (seq_len, 4, d_model)).astype(jnp.bfloat16)
    out3 = jax.block_until_ready(positional_encoding_forward(x3))
    ref3 = (x3.astype(jnp.float32) + _reference_pe(d_model, seq_len)).astype(jnp.bfloat16)
    assert out3.dtype == jnp.bfloat16
    assert jnp.allclose(out3.astype(jnp.float32), ref3.astype(jnp.float32),
                        atol=0.05, rtol=0.05), "mismatch (bf16)"

    print("KERNEL_OK")
</pallas_src>

<mosaic_0001>
module attributes {stable_mosaic.version = 11 : i64} {
  func.func @_pe_add_rows_kernel(%arg0: i32, %arg1: memref<2x32xf32, #tpu.memory_space<vmem>>, %arg2: memref<16x32xf32, #tpu.memory_space<vmem>>, %arg3: memref<16x32xf32, #tpu.memory_space<vmem>>) attributes {dimension_semantics = [#tpu.dimension_semantics<parallel>], iteration_bounds = array<i64: 1>, scalar_prefetch = 0 : i64, scratch_operands = 0 : i64, tpu.core_type = #tpu.core_type<tc>, window_params = [{pipeline_mode = #tpu.pipeline_mode<synchronous>, transform_indices = @transform_0, window_bounds = array<i64: 2, 32>}, {transform_indices = @transform_1, window_bounds = array<i64: 16, 32>}, {transform_indices = @transform_2, window_bounds = array<i64: 16, 32>}]} {
    %c16_i32 = arith.constant 16 : i32
    %0 = arith.muli %arg0, %c16_i32 : i32
    %1 = tpu.iota {dimensions = array<i32: 0>} : vector<16x1xi32>
    %2 = vector.broadcast %0 : i32 to vector<16x1xi32>
    %3 = arith.addi %1, %2 : vector<16x1xi32>
    %4 = arith.sitofp %3 : vector<16x1xi32> to vector<16x1xf32>
    %cst = arith.constant 5.000000e-01 : f32
    %5 = vector.broadcast %cst : f32 to vector<16x1xf32>
    %6 = arith.addf %4, %5 : vector<16x1xf32>
    %cst_0 = arith.constant 5.000000e-01 : f32
    %7 = vector.broadcast %cst_0 : f32 to vector<16x1xf32>
    %8 = arith.mulf %6, %7 : vector<16x1xf32>
    %9 = math.floor %8 : vector<16x1xf32>
    %c0 = arith.constant 0 : index
    %c0_1 = arith.constant 0 : index
    %10 = vector.load %arg1[%c0, %c0_1] : memref<2x32xf32, #tpu.memory_space<vmem>>, vector<1x32xf32>
    %11 = vector.broadcast %9 : vector<16x1xf32> to vector<16x32xf32>
    %12 = vector.broadcast %10 : vector<1x32xf32> to vector<16x32xf32>
    %13 = arith.mulf %11, %12 : vector<16x32xf32>
    %c1 = arith.constant 1 : index
    %c0_2 = arith.constant 0 : index
    %14 = vector.load %arg1[%c1, %c0_2] : memref<2x32xf32, #tpu.memory_space<vmem>>, vector<1x32xf32>
    %15 = vector.broadcast %14 : vector<1x32xf32> to vector<16x32xf32>
    %16 = arith.addf %13, %15 : vector<16x32xf32>
    %17 = math.sin %16 : vector<16x32xf32>
    %c0_3 = arith.constant 0 : index
    %c0_4 = arith.constant 0 : index
    %18 = vector.load %arg2[%c0_3, %c0_4] : memref<16x32xf32, #tpu.memory_space<vmem>>, vector<16x32xf32>
    %19 = arith.addf %18, %17 : vector<16x32xf32>
    %c0_5 = arith.constant 0 : index
    %c0_6 = arith.constant 0 : index
    %20 = vector.load %arg3[%c0_5, %c0_6] : memref<16x32xf32, #tpu.memory_space<vmem>>, vector<16x32xf32>
    tpu.vector_store %arg3[%c0_5, %c0_6], %19 {strides = array<i32>} : memref<16x32xf32, #tpu.memory_space<vmem>>, vector<16x32xf32>,
    return
  }
  func.func @transform_0(%arg0: i32) -> (i32, i32) {
    %c0_i32 = arith.constant 0 : i32
    %c0_i32_0 = arith.constant 0 : i32
    %c0_i32_1 = arith.constant 0 : i32
    return %c0_i32, %c0_i32_0 : i32, i32
  }
  func.func @transform_1(%arg0: i32) -> (i32, i32) {
    %c0_i32 = arith.constant 0 : i32
    %c0_i32_0 = arith.constant 0 : i32
    return %arg0, %c0_i32 : i32, i32
  }
  func.func @transform_2(%arg0: i32) -> (i32, i32) {
    %c0_i32 = arith.constant 0 : i32
    %c0_i32_0 = arith.constant 0 : i32
    return %arg0, %c0_i32 : i32, i32
  }
}

</mosaic_0001>

<llo_original>
// kernel: tpu_custom_call.1
$region0: #{tpu_custom_call.1}
  #allocation0 [shape = 'u32[]', space=smem, size = 0x4, offset = 0x4, fixed_abs, tag = 'smem constant byte address 0x4 - core index']
  #allocation1 [shape = 'u32[144,128]{1,0:T(1,128)}', space=vmem, size = 0x12000, scoped, tag = 'internal scratch']
  %s0 = inlined_call_operand.hbm [shape: f32[2,32], index: 0, kind: input, shape index: {}]
  %s1 = inlined_call_operand.hbm [shape: f32[16,32], index: 1, kind: input, shape index: {}]
  %s2 = inlined_call_operand.hbm [shape: f32[16,32], index: 2, kind: output, shape index: {}]
  %s3 = sld [smem:[#allocation0]]
  $region26: #{tpu_custom_call.1} parent=0
    _
  %s5 = ssub.s32 1, %s3
  %s6 = scalar_select 0, %s5, %s3
  $region1: #{tpu_custom_call.1} parent=0
    #allocation2 [shape = 'u8[1024]{0}', space=vmem, size = 0x400, scoped, tag = 'input window, operand 0, single buffered']
    #allocation3 [shape = 's32[1]{0}', space=sflag, size = 0x4, scoped, tag = 'scoped memory for tpu_custom_call.1']
    #allocation4 [shape = 's32[1]{0}', space=sflag, size = 0x4, scoped, tag = 'scoped memory for tpu_custom_call.1']
    #allocation5 [shape = 'u8[8192]{0}', space=vmem, size = 0x2000, scoped, tag = 'input window, operand 1, single buffered']
    #allocation6 [shape = 's32[1]{0}', space=sflag, size = 0x4, scoped, tag = 'scoped memory for tpu_custom_call.1']
    #allocation7 [shape = 'u8[8192]{0}', space=vmem, size = 0x2000, scoped, tag = 'output window, operand 0, single buffered']
    %7 = vsyncpa [#allocation3], 0
    %8 = vsyncpa [#allocation6], 0
    %9 = vsyncpa [#allocation4], 0
    // Predicated region
    $region2: #{tpu_custom_call.1} parent=1 // pred_check
      _
    $region3: #{tpu_custom_call.1} parent=1 // pred_check_branch
      %11 = sbr.rel (0) target = $region5
    $region4: #{tpu_custom_call.1} parent=1 // pred_region
      %s13 = ssub.s32 32, 32
      %14 = vsyncadd [#allocation3], %s13
      %s16 = sshll.u32 [#allocation2], 4
      %s17 = int_to_ptr.vmem [resolvable:$true] %s16
      %19 = dma.hbm_to_vmem [thread:$0]  %s0, 32, %s17, [#allocation3]
    $region5: #{tpu_custom_call.1} parent=1 // pred_fallthru
      _
    // Predicated region
    $region6: #{tpu_custom_call.1} parent=1 // pred_check
      _
    $region7: #{tpu_custom_call.1} parent=1 // pred_check_branch
      %21 = sbr.rel (0) target = $region9
    $region8: #{tpu_custom_call.1} parent=1 // pred_region
      %s23 = ssub.s32 256, 256
      %24 = vsyncadd [#allocation6], %s23
      %s25 = sshll.u32 [#allocation5], 4
      %s26 = int_to_ptr.vmem [resolvable:$true] %s25
      %31 = dma.hbm_to_vmem [thread:$0]  %s1, 256, %s26, [#allocation6], 128, 128, 8
    $region9: #{tpu_custom_call.1} parent=1 // pred_fallthru
      _
    // Predicated region
    $region10: #{tpu_custom_call.1} parent=1 // pred_check
      _
    $region11: #{tpu_custom_call.1} parent=1 // pred_check_branch
      %33 = sbr.rel (0) target = $region13
    $region12: #{tpu_custom_call.1} parent=1 // pred_region
      %34 = dma.done [#allocation3], 32
    $region13: #{tpu_custom_call.1} parent=1 // pred_fallthru
      _
    // Predicated region
    $region14: #{tpu_custom_call.1} parent=1 // pred_check
      _
    $region15: #{tpu_custom_call.1} parent=1 // pred_check_branch
      %36 = sbr.rel (0) target = $region17
    $region16: #{tpu_custom_call.1} parent=1 // pred_region
      %37 = dma.done [#allocation6], 256
    $region17: #{tpu_custom_call.1} parent=1 // pred_fallthru
      _
    %s38 = smul.u32 0, 16
    %v39 = vlaneseq
    %v40 = vshrl.u32 %v39, 7
    %v41 = vadd.s32 %v40, 8
    %v42 = vstv %s38
    %v43 = vadd.s32 %v40, %v42
    %v44 = vadd.s32 %v41, %v42
    %v45 = vcvt.s32.f32 %v43
    %v46 = vcvt.s32.f32 %v44
    %v47 = vadd.f32 %v45, 0.5
    %v48 = vadd.f32 %v46, 0.5
    %v49 = vmul.f32 %v47, 0.5
    %v50 = vmul.f32 %v48, 0.5
    %v51 = vfloor.f32 %v49
    %v52 = vfloor.f32 %v50
    %v53 = vld [vmem:[#allocation2] sm:$0x1]
    %v54 = vlaneseq
    %v55 = vshrl.u32 %v54, 7
    %v56 = vsub.s32 0, %v55
    %v57 = vrot.slane %v53, %v56
    %v58 = vmul.f32 %v51, %v57
    %v59 = vmul.f32 %v52, %v57
    %v60 = vld [vmem:[#allocation2 + $0x1] sm:$0x1]
    %v61 = vlaneseq
    %v62 = vshrl.u32 %v61, 7
    %v63 = vsub.s32 0, %v62
    %v64 = vrot.slane %v60, %v63
    %v65 = vadd.f32 %v58, %v64
    %v66 = vadd.f32 %v59, %v64
    %v67 = vand.u32 2147483647, %v65
    %vm68 = vcmp.le.f32.partialorder %v67, 0.7853982
    %vm69 = vcmp.lt.s32.totalorder %v65, 0
    %v70 = vand.u32 %v65, 2139095040
    %v71 = vshrl.u32 %v70, 23
    %v72 = vsub.s32 %v71, 127
    %v73 = vand.u32 2147483647, %v65
    %v74 = vand.u32 %v73, 8388607
    %v75 = vor.u32 %v74, 8388608
    %v76 = vsub.s32 0, %v75
    %v77 = vadd.s32 %v72, 1
    %vm78 = vcmp.gt.s32.totalorder %v77, 0
    %v79 = vsel %vm78, %v77, 0
    %v80 = vshrl.u32 %v79, 5
    %v81 = vand.u32 %v79, 31
    %v82 = vsub.s32 32, %v81
    %v83 = vshrl.u32 683565275, %v82
    %v84 = vshll.u32 683565275, %v81
    %v85 = vshrl.u32 2475754826, %v82
    %v86 = vor.u32 %v84, %v85
    %v87 = vshll.u32 2475754826, %v81
    %v88 = vshrl.u32 2131351028, %v82
    %v89 = vor.u32 %v87, %v88
    %v90 = vshll.u32 2131351028, %v81
    %v91 = vshrl.u32 2102212464, %v82
    %v92 = vor.u32 %v90, %v91
    %v93 = vshll.u32 2102212464, %v81
    %v94 = vshrl.u32 920167782, %v82
    %v95 = vor.u32 %v93, %v94
    %v96 = vshll.u32 920167782, %v81
    %v97 = vshrl.u32 1326507024, %v82
    %v98 = vor.u32 %v96, %v97
    %vm99 = vcmp.lt.s32.totalorder %v80, 1
    %vm100 = vcmp.lt.s32.totalorder %v80, 2
    %vm101 = vcmp.lt.s32.totalorder %v80, 3
    %vm102 = vcmp.lt.s32.totalorder %v80, 4
    %v103 = vsel %vm99, %v83, %v86
    %v104 = vsel %vm102, %v92, 2102212464
    %v105 = vsel %vm101, %v89, %v104
    %v106 = vsel %vm100, %v103, %v105
    %v107 = vsel %vm99, %v86, %v89
    %v108 = vsel %vm102, %v95, 920167782
    %v109 = vsel %vm101, %v92, %v108
    %v110 = vsel %vm100, %v107, %v109
    %v111 = vsel %vm99, %v89, %v92
    %v112 = vsel %vm102, %v98, 1326507024
    %v113 = vsel %vm101, %v95, %v112
    %v114 = vsel %vm100, %v111, %v113
    %v115 = vshll.u32 %v75, 8
    %v116 = vmul.u32.u64.compose %v115, %v114
    %v117 = vextract.low.u32 %v116
    %v118 = vextract.high.u32 %v116
    %v119 = vmul.u32.u64.compose %v115, %v110
    %v120 = vextract.low.u32 %v119
    %v121 = vextract.high.u32 %v119
    %v122 = vmul.u32 %v115, %v106
    %v123 = vadd.s32 %v118, %v120
    %vm124 = vc.u32 %v118, %v120
    %v125 = vadd.s32 %v121, 1
    %v126 = vsel %vm124, %v125, %v121
    %v127 = vadd.s32 %v122, %v126
    %v128 = vadd.s32 %v127, 536870912
    %v129 = vshrl.u32 %v128, 30
    %v130 = vshll.u32 %v129, 30
    %v131 = vsub.s32 %v127, %v130
    %vm132 = vcmp.lt.s32.totalorder %v131, 0
    %v133 = vsub.s32 0, %v131
    %v134 = vsel %vm132, %v133, %v131
    %v135 = vclz %v134
    %v136 = vsub.s32 %v135, 2
    %vm137 = vcmp.gt.s32.totalorder 0, %v136
    %v138 = vsel %vm137, 0, %v136
    %v139 = vsub.s32 32, %v138
    %v140 = vshll.u32 %v131, %v138
    %v141 = vshrl.u32 %v123, %v139
    %v142 = vor.u32 %v140, %v141
    %v143 = vsub.s32 4294967266, %v138
    %v144 = vadd.s32 %v143, 127
    %v145 = vshll.u32 %v144, 23
    %v146 = vor.u32 4788187, %v145
    %v147 = vand.u32 2147483647, %v146
    %v149 = vcvt.s32.f32 %v142
    %v150 = vmul.f32 %v149, %v147
    %v151 = vxor.u32 %v150, 2147483648
    %v152 = vsel %vm69, %v151, %v150
    %v153 = vsub.s32 4, %v129
    %v154 = vsel %vm69, %v153, %v129
    %v155 = vsel %vm68, %v65, %v152
    %v156 = vsel %vm68, 0, %v154
    %v157 = vcosq.f32.pop %v155
    %v158 = vsinq.f32.pop %v155
    %vm159 = vweird.f32 %v65
    %v160 = vadd.s32 %v156, 3
    %v161 = vand.u32 %v160, 3
    %vm162 = vcmp.lt.s32.totalorder %v161, 2
    %vm163 = vcmp.eq.s32.totalorder %v161, 0
    %v164 = vxor.u32 %v158, 2147483648
    %v165 = vsel %vm163, %v157, %v164
    %vm166 = vcmp.eq.s32.totalorder %v161, 2
    %v167 = vxor.u32 %v157, 2147483648
    %v168 = vsel %vm166, %v167, %v158
    %v169 = vsel %vm162, %v165, %v168
    %v170 = vsel %vm159, nan, %v169
    %v171 = vand.u32 2147483647, %v66
    %vm172 = vcmp.le.f32.partialorder %v171, 0.7853982
    %vm173 = vcmp.lt.s32.totalorder %v66, 0
    %v174 = vand.u32 %v66, 2139095040
    %v175 = vshrl.u32 %v174, 23
    %v176 = vsub.s32 %v175, 127
    %v177 = vand.u32 2147483647, %v66
    %v178 = vand.u32 %v177, 8388607
    %v179 = vor.u32 %v178, 8388608
    %v180 = vsub.s32 0, %v179
    %v181 = vadd.s32 %v176, 1
    %vm182 = vcmp.gt.s32.totalorder %v181, 0
    %v183 = vsel %vm182, %v181, 0
    %v184 = vshrl.u32 %v183, 5
    %v185 = vand.u32 %v183, 31
    %v186 = vsub.s32 32, %v185
    %v187 = vshrl.u32 683565275, %v186
    %v188 = vshll.u32 683565275, %v185
    %v189 = vshrl.u32 2475754826, %v186
    %v190 = vor.u32 %v188, %v189
    %v191 = vshll.u32 2475754826, %v185
    %v192 = vshrl.u32 2131351028, %v186
    %v193 = vor.u32 %v191, %v192
    %v194 = vshll.u32 2131351028, %v185
    %v195 = vshrl.u32 2102212464, %v186
    %v196 = vor.u32 %v194, %v195
    %v197 = vshll.u32 2102212464, %v185
    %v198 = vshrl.u32 920167782, %v186
    %v199 = vor.u32 %v197, %v198
    %v200 = vshll.u32 920167782, %v185
    %v201 = vshrl.u32 1326507024, %v186
    %v202 = vor.u32 %v200, %v201
    %vm203 = vcmp.lt.s32.totalorder %v184, 1
    %vm204 = vcmp.lt.s32.totalorder %v184, 2
    %vm205 = vcmp.lt.s32.totalorder %v184, 3
    %vm206 = vcmp.lt.s32.totalorder %v184, 4
    %v207 = vsel %vm203, %v187, %v190
    %v208 = vsel %vm206, %v196, 2102212464
    %v209 = vsel %vm205, %v193, %v208
    %v210 = vsel %vm204, %v207, %v209
    %v211 = vsel %vm203, %v190, %v193
    %v212 = vsel %vm206, %v199, 920167782
    %v213 = vsel %vm205, %v196, %v212
    %v214 = vsel %vm204, %v211, %v213
    %v215 = vsel %vm203, %v193, %v196
    %v216 = vsel %vm206, %v202, 1326507024
    %v217 = vsel %vm205, %v199, %v216
    %v218 = vsel %vm204, %v215, %v217
    %v219 = vshll.u32 %v179, 8
    %v220 = vmul.u32.u64.compose %v219, %v218
    %v221 = vextract.low.u32 %v220
    %v222 = vextract.high.u32 %v220
    %v223 = vmul.u32.u64.compose %v219, %v214
    %v224 = vextract.low.u32 %v223
    %v225 = vextract.high.u32 %v223
    %v226 = vmul.u32 %v219, %v210
    %v227 = vadd.s32 %v222, %v224
    %vm228 = vc.u32 %v222, %v224
    %v229 = vadd.s32 %v225, 1
    %v230 = vsel %vm228, %v229, %v225
    %v231 = vadd.s32 %v226, %v230
    %v232 = vadd.s32 %v231, 536870912
    %v233 = vshrl.u32 %v232, 30
    %v234 = vshll.u32 %v233, 30
    %v235 = vsub.s32 %v231, %v234
    %vm236 = vcmp.lt.s32.totalorder %v235, 0
    %v237 = vsub.s32 0, %v235
    %v238 = vsel %vm236, %v237, %v235
    %v239 = vclz %v238
    %v240 = vsub.s32 %v239, 2
    %vm241 = vcmp.gt.s32.totalorder 0, %v240
    %v242 = vsel %vm241, 0, %v240
    %v243 = vsub.s32 32, %v242
    %v244 = vshll.u32 %v235, %v242
    %v245 = vshrl.u32 %v227, %v243
    %v246 = vor.u32 %v244, %v245
    %v247 = vsub.s32 4294967266, %v242
    %v248 = vadd.s32 %v247, 127
    %v249 = vshll.u32 %v248, 23
    %v250 = vor.u32 4788187, %v249
    %v251 = vand.u32 2147483647, %v250
    %v253 = vcvt.s32.f32 %v246
    %v254 = vmul.f32 %v253, %v251
    %v255 = vxor.u32 %v254, 2147483648
    %v256 = vsel %vm173, %v255, %v254
    %v257 = vsub.s32 4, %v233
    %v258 = vsel %vm173, %v257, %v233
    %v259 = vsel %vm172, %v66, %v256
    %v260 = vsel %vm172, 0, %v258
    %v261 = vcosq.f32.pop %v259
    %v262 = vsinq.f32.pop %v259
    %vm263 = vweird.f32 %v66
    %v264 = vadd.s32 %v260, 3
    %v265 = vand.u32 %v264, 3
    %vm266 = vcmp.lt.s32.totalorder %v265, 2
    %vm267 = vcmp.eq.s32.totalorder %v265, 0
    %v268 = vxor.u32 %v262, 2147483648
    %v269 = vsel %vm267, %v261, %v268
    %vm270 = vcmp.eq.s32.totalorder %v265, 2
    %v271 = vxor.u32 %v261, 2147483648
    %v272 = vsel %vm270, %v271, %v262
    %v273 = vsel %vm266, %v269, %v272
    %v274 = vsel %vm263, nan, %v273
    %v275 = vld [vmem:[#allocation5] sm:$0xff]
    %v276 = vld [vmem:[#allocation5 + $0x8] sm:$0xff]
    %v277 = vadd.f32 %v275, %v170
    %v278 = vadd.f32 %v276, %v274
    %vm279 = vcmask 261120
    %280 = vst.msk [vmem:[#allocation7] sm:$0xff] %vm279, %v277
    %281 = vst.msk [vmem:[#allocation7 + $0x8] sm:$0xff] %vm279, %v278
    // Predicated region
    $region18: #{tpu_custom_call.1} parent=1 // pred_check
      _
    $region19: #{tpu_custom_call.1} parent=1 // pred_check_branch
      %283 = sbr.rel (0) target = $region21
    $region20: #{tpu_custom_call.1} parent=1 // pred_region
      %s285 = ssub.s32 256, 256
      %286 = vsyncadd [#allocation4], %s285
      %s287 = sshll.u32 [#allocation7], 4
      %s288 = int_to_ptr.vmem [resolvable:$true] %s287
      %293 = dma.vmem_to_hbm [thread:$0]  %s288, 256, %s2, [#allocation4], 128, 128, 8
    $region21: #{tpu_custom_call.1} parent=1 // pred_fallthru
      _
    // Predicated region
    $region22: #{tpu_custom_call.1} parent=1 // pred_check
      _
    $region23: #{tpu_custom_call.1} parent=1 // pred_check_branch
      %295 = sbr.rel (0) target = $region25
    $region24: #{tpu_custom_call.1} parent=1 // pred_region
      %296 = dma.done [#allocation4], 256
    $region25: #{tpu_custom_call.1} parent=1 // pred_fallthru
      _
    %297 = vsyncpa [#allocation3], 1
    %298 = vsyncpa [#allocation6], 1
    %299 = vsyncpa [#allocation4], 1

</llo_original>
